<compile_context>
chip_gen: v7x
topology: tpu7x:2x2x1
jax: 0.10.0
libtpu: 0.0.40
codegen_flags: <defaults>
</compile_context>

<pallas_src>
import functools
import math

import jax
import jax.numpy as jnp
from jax import lax
from jax.experimental import pallas as pl
from jax.experimental.pallas import tpu as pltpu


def _round_up(x, m):
    return (x + m - 1) // m * m


def _vmem_capacity_bytes():
    """Generation-aware VMEM capacity (v5e/v6e: 128 MiB, v7x: 64 MiB per TC)."""
    try:
        info = pltpu.get_tpu_info()
        for name in ("vmem_capacity_bytes", "vmem_size_bytes", "vmem_bytes"):
            cap = getattr(info, name, None)
            if cap:
                return int(cap)
    except Exception:
        pass
    return 64 * 1024 * 1024  # conservative default (v7x per-core)


def _split_weight_refs(num_layers, refs):
    """refs -> (w0u, w0i, b0, tower[(w, b), ...], wpg, wpm, bp, rest_refs)."""
    w0u, w0i, b0 = refs[0], refs[1], refs[2]
    tower = []
    k = 3
    for _ in range(num_layers - 1):
        tower.append((refs[k], refs[k + 1]))
        k += 2
    wpg, wpm, bp = refs[k], refs[k + 1], refs[k + 2]
    return w0u, w0i, b0, tower, wpg, wpm, bp, refs[k + 3:]


def _neumf_compute(u_rows, i_rows, w0u_ref, w0i_ref, b0_ref, tower,
                   wpg_ref, wpm_ref, bp_ref, tile_b):
    """Shared NeuMF math on gathered (tile_b, D_tot) user/item slabs."""
    # GMF contribution: full-width product; wpg_pad is zero on the MLP columns,
    # so no lane slicing is needed anywhere.
    prod = u_rows * i_rows                                    # (tile_b, D_tot)

    # MLP tower: first layer via zero-padded split weights (no lane concat).
    # TODO(synk): nn.Dropout is identity at inference; not applied here.
    x = jnp.dot(u_rows, w0u_ref[...], preferred_element_type=jnp.float32)
    x = x + jnp.dot(i_rows, w0i_ref[...], preferred_element_type=jnp.float32)
    x = jnp.maximum(x + b0_ref[...], 0.0)
    for w_ref, b_ref in tower:
        x = jnp.dot(x, w_ref[...], preferred_element_type=jnp.float32) + b_ref[...]
        x = jnp.maximum(x, 0.0)

    # Predict layer: VPU multiplies + lane reductions (no N=1 MXU matmul).
    s = jnp.sum(prod * wpg_ref[...], axis=-1) + jnp.sum(x * wpm_ref[...], axis=-1)
    return s.reshape(1, tile_b) + bp_ref[...]                 # (1, tile_b)


# --------------------------------------------------------------------------- #
# Path A: VMEM-resident tables, one-hot MXU gather (no per-row DMAs).
# --------------------------------------------------------------------------- #
def _neumf_resident_kernel(num_layers, tile_b, user_num, item_num,
                           uidx_ref, iidx_ref, utab_ref, itab_ref, *refs):
    (w0u_ref, w0i_ref, b0_ref, tower,
     wpg_ref, wpm_ref, bp_ref, rest) = _split_weight_refs(num_layers, refs)
    out_ref = rest[0]

    uidx = uidx_ref[0]                                   # (tile_b, 1) int32
    iidx = iidx_ref[0]
    onehot_u = (uidx == lax.broadcasted_iota(jnp.int32, (tile_b, user_num), 1)
                ).astype(jnp.float32)
    onehot_i = (iidx == lax.broadcasted_iota(jnp.int32, (tile_b, item_num), 1)
                ).astype(jnp.float32)
    u_rows = jnp.dot(onehot_u, utab_ref[...], preferred_element_type=jnp.float32)
    i_rows = jnp.dot(onehot_i, itab_ref[...], preferred_element_type=jnp.float32)

    row = _neumf_compute(u_rows, i_rows, w0u_ref, w0i_ref, b0_ref, tower,
                         wpg_ref, wpm_ref, bp_ref, tile_b)
    out_ref[0] = row.astype(out_ref.dtype)


# --------------------------------------------------------------------------- #
# Path B: HBM per-row gather with cross-tile double-buffering.
# --------------------------------------------------------------------------- #
def _neumf_gather_kernel(num_layers, tile_b, unroll,
                         user_idx_ref, item_idx_ref,
                         utab_hbm, itab_hbm, *refs):
    (w0u_ref, w0i_ref, b0_ref, tower,
     wpg_ref, wpm_ref, bp_ref, rest) = _split_weight_refs(num_layers, refs)
    out_ref, u_buf, i_buf, sem = rest[0], rest[1], rest[2], rest[3]

    t = pl.program_id(0)
    nt = pl.num_programs(0)
    slot = t % 2

    def row_copies(tile_idx, dst_slot, r):
        base = tile_idx * tile_b                         # hoisted per-tile
        u = user_idx_ref[base + r]
        it = item_idx_ref[base + r]
        cu = pltpu.make_async_copy(utab_hbm.at[pl.ds(u, 1), :],
                                   u_buf.at[dst_slot, pl.ds(r, 1), :],
                                   sem.at[0, dst_slot])
        ci = pltpu.make_async_copy(itab_hbm.at[pl.ds(it, 1), :],
                                   i_buf.at[dst_slot, pl.ds(r, 1), :],
                                   sem.at[1, dst_slot])
        return cu, ci

    def issue_tile(tile_idx, dst_slot):
        def body(r, carry):
            cu, ci = row_copies(tile_idx, dst_slot, r)
            cu.start()
            ci.start()
            return carry
        lax.fori_loop(0, tile_b, body, 0, unroll=unroll)

    # Prime the pipeline on the first grid step (grid axis is sequential).
    @pl.when(t == 0)
    def _():
        issue_tile(0, 0)

    # Cross-tile prefetch: start tile t+1's gather before draining/computing t.
    # NOTE: up to ~2*tile_b copies in flight per tile (a perf hazard only if
    # the HW outstanding-DMA queue fills; it never affects correctness).
    @pl.when(t + 1 < nt)
    def _():
        issue_tile(t + 1, 1 - slot)

    # Drain the current slot with descriptors identical to the ones started.
    # All row copies on sem[e, slot] are the same size, so counting waits are
    # exact regardless of completion order.
    def drain_body(r, carry):
        cu, ci = row_copies(t, slot, r)
        cu.wait()
        ci.wait()
        return carry
    lax.fori_loop(0, tile_b, drain_body, 0, unroll=unroll)

    u_rows = u_buf[slot]
    i_rows = i_buf[slot]
    row = _neumf_compute(u_rows, i_rows, w0u_ref, w0i_ref, b0_ref, tower,
                         wpg_ref, wpm_ref, bp_ref, tile_b)
    out_ref[0] = row.astype(out_ref.dtype)


# --------------------------------------------------------------------------- #
# Parameter init (matches PointNeuMF._init_weight_, NeuMF-end) and wrapper.
# --------------------------------------------------------------------------- #
def init_params(key, user_num, item_num, factors, num_layers):
    n_keys = 4 + num_layers + 1
    keys = jax.random.split(key, n_keys)
    mlp_emb_dim = factors * 2 ** (num_layers - 1)

    params = {
        "embed_user_GMF": 0.01 * jax.random.normal(keys[0], (user_num, factors), jnp.float32),
        "embed_item_GMF": 0.01 * jax.random.normal(keys[1], (item_num, factors), jnp.float32),
        "embed_user_MLP": 0.01 * jax.random.normal(keys[2], (user_num, mlp_emb_dim), jnp.float32),
        "embed_item_MLP": 0.01 * jax.random.normal(keys[3], (item_num, mlp_emb_dim), jnp.float32),
    }

    for i in range(num_layers):
        in_size = factors * 2 ** (num_layers - i)
        out_size = in_size // 2
        limit = math.sqrt(6.0 / (in_size + out_size))
        # torch weight is (out, in); store pre-transposed (in, out) for the kernel.
        w = jax.random.uniform(keys[4 + i], (out_size, in_size), jnp.float32, -limit, limit)
        params[f"mlp_w{i}"] = w.T
        params[f"mlp_b{i}"] = jnp.zeros((1, out_size), jnp.float32)

    # predict layer: kaiming_uniform(a=1, nonlinearity='sigmoid') -> gain=1, zero bias.
    predict_size = factors * 2  # NeuMF-end
    bound = math.sqrt(3.0) / math.sqrt(predict_size)
    wp = jax.random.uniform(keys[4 + num_layers], (1, predict_size), jnp.float32, -bound, bound)
    params["pred_w"] = wp.T                               # (2*factors, 1)
    params["pred_b"] = jnp.zeros((1, 1), jnp.float32)
    return params


def neumf_forward(params, user, item, num_layers, tile_b=None,
                  force_hbm_gather=False):
    factors = params["embed_user_GMF"].shape[1]
    mlp_dim = params["embed_user_MLP"].shape[1]
    d_tot = factors + mlp_dim
    user_num = params["embed_user_GMF"].shape[0]
    item_num = params["embed_item_GMF"].shape[0]
    batch = user.shape[0]

    # Batch tile: multiple of 8 sublanes; big enough to amortize per-grid-step
    # overhead, small enough that modest batches still give >= 2 grid steps.
    if tile_b is None:
        tile_b = min(512, max(8, _round_up(-(-batch // 2), 8)))
    tile_b = max(8, _round_up(tile_b, 8))
    b_pad = _round_up(batch, tile_b)
    num_tiles = b_pad // tile_b

    user_idx = jnp.pad(user.astype(jnp.int32), (0, b_pad - batch))
    item_idx = jnp.pad(item.astype(jnp.int32), (0, b_pad - batch))

    # Coalesced per-entity tables: one row fetch brings both GMF and MLP parts.
    user_tab = jnp.concatenate([params["embed_user_GMF"], params["embed_user_MLP"]], axis=1)
    item_tab = jnp.concatenate([params["embed_item_GMF"], params["embed_item_MLP"]], axis=1)

    # Wrapper-side weight re-layout (tiny, one-time): the first MLP layer and
    # the predict layer act directly on the fused (GMF | MLP) slab, with zero
    # weights on the columns they ignore -> no in-kernel concat or lane slices.
    h0 = params["mlp_w0"].shape[1]
    w0 = params["mlp_w0"]                                  # (2*mlp_dim, h0)
    zero_g = jnp.zeros((factors, h0), jnp.float32)
    w0u_pad = jnp.concatenate([zero_g, w0[:mlp_dim]], axis=0)   # (d_tot, h0)
    w0i_pad = jnp.concatenate([zero_g, w0[mlp_dim:]], axis=0)   # (d_tot, h0)
    wp = params["pred_w"]                                  # (2*factors, 1)
    wpg_pad = jnp.concatenate(
        [wp[:factors, 0], jnp.zeros((mlp_dim,), jnp.float32)]).reshape(1, d_tot)
    wpm = wp[factors:, 0].reshape(1, factors)

    weight_inputs = [w0u_pad, w0i_pad, params["mlp_b0"]]
    for i in range(1, num_layers):
        weight_inputs += [params[f"mlp_w{i}"], params[f"mlp_b{i}"]]
    weight_inputs += [wpg_pad, wpm, params["pred_b"]]

    out_shape = jax.ShapeDtypeStruct((num_tiles, 1, tile_b), jnp.float32)

    # ---- generation-aware path selection ------------------------------------
    vmem_cap = _vmem_capacity_bytes()
    vmem_limit = min(vmem_cap // 2, 64 * 1024 * 1024)
    b4 = 4
    table_bytes = (user_num + item_num) * d_tot * b4
    onehot_bytes = 2 * tile_b * (user_num + item_num) * b4
    rows_bytes = 2 * tile_b * d_tot * b4
    weight_bytes = sum(int(w.size) * b4 for w in weight_inputs)
    resident_need = table_bytes + onehot_bytes + rows_bytes + weight_bytes
    use_resident = (not force_hbm_gather) and (2 * resident_need < vmem_limit)

    if use_resident:
        # -------- Path A: tables VMEM-resident, gather = one-hot MXU matmul --
        uidx3 = user_idx.reshape(num_tiles, tile_b, 1)
        iidx3 = item_idx.reshape(num_tiles, tile_b, 1)

        def const_spec(arr):
            return pl.BlockSpec(arr.shape, lambda t: (0, 0))

        idx_spec = pl.BlockSpec((1, tile_b, 1), lambda t: (t, 0, 0))
        in_specs = ([idx_spec, idx_spec, const_spec(user_tab), const_spec(item_tab)]
                    + [const_spec(w) for w in weight_inputs])
        out_spec = pl.BlockSpec((1, 1, tile_b), lambda t: (t, 0, 0))

        kernel = functools.partial(_neumf_resident_kernel, num_layers, tile_b,
                                   user_num, item_num)
        out = pl.pallas_call(
            kernel,
            out_shape=out_shape,
            grid_spec=pltpu.PrefetchScalarGridSpec(
                num_scalar_prefetch=0,
                grid=(num_tiles,),
                in_specs=in_specs,
                out_specs=out_spec,
            ),
            compiler_params=pltpu.CompilerParams(
                dimension_semantics=("parallel",),
                vmem_limit_bytes=vmem_limit,
            ),
        )(uidx3, iidx3, user_tab, item_tab, *weight_inputs)
    else:
        # -------- Path B: HBM gather, 2 DMAs/row, cross-tile double-buffer ---
        def const_spec(arr):
            return pl.BlockSpec(arr.shape, lambda t, *_: (0, 0))

        in_specs = ([pl.BlockSpec(memory_space=pl.ANY),       # user table (HBM)
                     pl.BlockSpec(memory_space=pl.ANY)]       # item table (HBM)
                    + [const_spec(w) for w in weight_inputs])
        out_spec = pl.BlockSpec((1, 1, tile_b), lambda t, *_: (t, 0, 0))

        scratch_shapes = [
            pltpu.VMEM((2, tile_b, d_tot), jnp.float32),      # user slab x2
            pltpu.VMEM((2, tile_b, d_tot), jnp.float32),      # item slab x2
            pltpu.SemaphoreType.DMA((2, 2)),                  # [entity, slot]
        ]

        unroll = min(8, tile_b)
        kernel = functools.partial(_neumf_gather_kernel, num_layers, tile_b, unroll)
        out = pl.pallas_call(
            kernel,
            out_shape=out_shape,
            grid_spec=pltpu.PrefetchScalarGridSpec(
                num_scalar_prefetch=2,
                grid=(num_tiles,),
                in_specs=in_specs,
                out_specs=out_spec,
                scratch_shapes=scratch_shapes,
            ),
            compiler_params=pltpu.CompilerParams(
                # "arbitrary": cross-tile prefetch carries state in scratch, so
                # the grid must run in order on a single core.
                dimension_semantics=("arbitrary",),
                vmem_limit_bytes=vmem_limit,
            ),
        )(user_idx, item_idx, user_tab, item_tab, *weight_inputs)

    return out.reshape(-1)[:batch]  # matches prediction.view(-1)


def neumf_reference(params, user, item, num_layers):
    gu = params["embed_user_GMF"][user]
    gi = params["embed_item_GMF"][item]
    mu = params["embed_user_MLP"][user]
    mi = params["embed_item_MLP"][item]
    output_gmf = gu * gi
    x = jnp.concatenate([mu, mi], axis=-1)
    for i in range(num_layers):
        x = jnp.maximum(x @ params[f"mlp_w{i}"] + params[f"mlp_b{i}"], 0.0)
    concat = jnp.concatenate([output_gmf, x], axis=-1)
    return (concat @ params["pred_w"] + params["pred_b"]).reshape(-1)


if __name__ == "__main__":
    USER_NUM, ITEM_NUM = 32, 48
    FACTORS, NUM_LAYERS = 8, 3
    BATCH = 8

    key = jax.random.PRNGKey(0)
    k_params, k_user, k_item = jax.random.split(key, 3)

    params = init_params(k_params, USER_NUM, ITEM_NUM, FACTORS, NUM_LAYERS)
    user = jax.random.randint(k_user, (BATCH,), 0, USER_NUM, dtype=jnp.int32)
    item = jax.random.randint(k_item, (BATCH,), 0, ITEM_NUM, dtype=jnp.int32)

    ref = neumf_reference(params, user, item, NUM_LAYERS)

    # Path A: VMEM-resident tables (default for this small catalog).
    pred = jax.block_until_ready(neumf_forward(params, user, item, NUM_LAYERS))
    assert pred.shape == (BATCH,)
    assert jnp.allclose(pred, ref, atol=1e-5, rtol=1e-5), (pred, ref)

    # Path B: HBM per-row gather with cross-tile double-buffering (forced;
    # also exercises a ragged batch -> padding + multiple grid tiles).
    BATCH2 = 21
    k_user2, k_item2 = jax.random.split(jax.random.PRNGKey(1), 2)
    user2 = jax.random.randint(k_user2, (BATCH2,), 0, USER_NUM, dtype=jnp.int32)
    item2 = jax.random.randint(k_item2, (BATCH2,), 0, ITEM_NUM, dtype=jnp.int32)
    ref2 = neumf_reference(params, user2, item2, NUM_LAYERS)
    pred2 = jax.block_until_ready(
        neumf_forward(params, user2, item2, NUM_LAYERS, tile_b=8,
                      force_hbm_gather=True))
    assert pred2.shape == (BATCH2,)
    assert jnp.allclose(pred2, ref2, atol=1e-5, rtol=1e-5), (pred2, ref2)

    print("KERNEL_OK")
</pallas_src>

<mosaic_0001>
module attributes {stable_mosaic.version = 11 : i64} {
  func.func @_neumf_resident_kernel(%arg0: i32, %arg1: memref<1x8x1xi32, #tpu.memory_space<vmem>>, %arg2: memref<1x8x1xi32, #tpu.memory_space<vmem>>, %arg3: memref<32x40xf32, #tpu.memory_space<vmem>>, %arg4: memref<48x40xf32, #tpu.memory_space<vmem>>, %arg5: memref<40x32xf32, #tpu.memory_space<vmem>>, %arg6: memref<40x32xf32, #tpu.memory_space<vmem>>, %arg7: memref<1x32xf32, #tpu.memory_space<vmem>>, %arg8: memref<32x16xf32, #tpu.memory_space<vmem>>, %arg9: memref<1x16xf32, #tpu.memory_space<vmem>>, %arg10: memref<16x8xf32, #tpu.memory_space<vmem>>, %arg11: memref<1x8xf32, #tpu.memory_space<vmem>>, %arg12: memref<1x40xf32, #tpu.memory_space<vmem>>, %arg13: memref<1x8xf32, #tpu.memory_space<vmem>>, %arg14: memref<1x1xf32, #tpu.memory_space<vmem>>, %arg15: memref<1x1x8xf32, #tpu.memory_space<vmem>>) attributes {dimension_semantics = [#tpu.dimension_semantics<parallel>], iteration_bounds = array<i64: 1>, scalar_prefetch = 0 : i64, scratch_operands = 0 : i64, tpu.core_type = #tpu.core_type<tc>, window_params = [{transform_indices = @transform_0, window_bounds = array<i64: 1, 8, 1>}, {transform_indices = @transform_1, window_bounds = array<i64: 1, 8, 1>}, {pipeline_mode = #tpu.pipeline_mode<synchronous>, transform_indices = @transform_2, window_bounds = array<i64: 32, 40>}, {pipeline_mode = #tpu.pipeline_mode<synchronous>, transform_indices = @transform_3, window_bounds = array<i64: 48, 40>}, {pipeline_mode = #tpu.pipeline_mode<synchronous>, transform_indices = @transform_4, window_bounds = array<i64: 40, 32>}, {pipeline_mode = #tpu.pipeline_mode<synchronous>, transform_indices = @transform_5, window_bounds = array<i64: 40, 32>}, {pipeline_mode = #tpu.pipeline_mode<synchronous>, transform_indices = @transform_6, window_bounds = array<i64: 1, 32>}, {pipeline_mode = #tpu.pipeline_mode<synchronous>, transform_indices = @transform_7, window_bounds = array<i64: 32, 16>}, {pipeline_mode = #tpu.pipeline_mode<synchronous>, transform_indices = @transform_8, window_bounds = array<i64: 1, 16>}, {pipeline_mode = #tpu.pipeline_mode<synchronous>, transform_indices = @transform_9, window_bounds = array<i64: 16, 8>}, {pipeline_mode = #tpu.pipeline_mode<synchronous>, transform_indices = @transform_10, window_bounds = array<i64: 1, 8>}, {pipeline_mode = #tpu.pipeline_mode<synchronous>, transform_indices = @transform_11, window_bounds = array<i64: 1, 40>}, {pipeline_mode = #tpu.pipeline_mode<synchronous>, transform_indices = @transform_12, window_bounds = array<i64: 1, 8>}, {pipeline_mode = #tpu.pipeline_mode<synchronous>, transform_indices = @transform_13, window_bounds = array<i64: 1, 1>}, {transform_indices = @transform_14, window_bounds = array<i64: 1, 1, 8>}]} {
    %c0 = arith.constant 0 : index
    %c0_0 = arith.constant 0 : index
    %c0_1 = arith.constant 0 : index
    %0 = vector.load %arg1[%c0, %c0_0, %c0_1] : memref<1x8x1xi32, #tpu.memory_space<vmem>>, vector<1x8x1xi32>
    %1 = vector.shape_cast %0 : vector<1x8x1xi32> to vector<8x1xi32>
    %c0_2 = arith.constant 0 : index
    %c0_3 = arith.constant 0 : index
    %c0_4 = arith.constant 0 : index
    %2 = vector.load %arg2[%c0_2, %c0_3, %c0_4] : memref<1x8x1xi32, #tpu.memory_space<vmem>>, vector<1x8x1xi32>
    %3 = vector.shape_cast %2 : vector<1x8x1xi32> to vector<8x1xi32>
    %4 = tpu.iota {dimensions = array<i32: 1>} : vector<8x32xi32>
    %5 = vector.broadcast %1 : vector<8x1xi32> to vector<8x32xi32>
    %6 = arith.cmpi eq, %5, %4 : vector<8x32xi32>
    %7 = arith.extui %6 : vector<8x32xi1> to vector<8x32xi32>
    %8 = arith.sitofp %7 : vector<8x32xi32> to vector<8x32xf32>
    %9 = tpu.iota {dimensions = array<i32: 1>} : vector<8x48xi32>
    %10 = vector.broadcast %3 : vector<8x1xi32> to vector<8x48xi32>
    %11 = arith.cmpi eq, %10, %9 : vector<8x48xi32>
    %12 = arith.extui %11 : vector<8x48xi1> to vector<8x48xi32>
    %13 = arith.sitofp %12 : vector<8x48xi32> to vector<8x48xf32>
    %c0_5 = arith.constant 0 : index
    %c0_6 = arith.constant 0 : index
    %14 = vector.load %arg3[%c0_5, %c0_6] : memref<32x40xf32, #tpu.memory_space<vmem>>, vector<32x40xf32>
    %cst = arith.constant dense<0.000000e+00> : vector<8x40xf32>
    %15 = tpu.matmul %8, %14, %cst {dimension_numbers = #tpu.dot_dimension_numbers<[1], [0], [0], [1], [0, 0, 1, 1], [], []>} : vector<8x32xf32>, vector<32x40xf32>, vector<8x40xf32> -> vector<8x40xf32>
    %c0_7 = arith.constant 0 : index
    %c0_8 = arith.constant 0 : index
    %16 = vector.load %arg4[%c0_7, %c0_8] : memref<48x40xf32, #tpu.memory_space<vmem>>, vector<48x40xf32>
    %cst_9 = arith.constant dense<0.000000e+00> : vector<8x40xf32>
    %17 = tpu.matmul %13, %16, %cst_9 {dimension_numbers = #tpu.dot_dimension_numbers<[1], [0], [0], [1], [0, 0, 1, 1], [], []>} : vector<8x48xf32>, vector<48x40xf32>, vector<8x40xf32> -> vector<8x40xf32>
    %18 = arith.mulf %15, %17 : vector<8x40xf32>
    %c0_10 = arith.constant 0 : index
    %c0_11 = arith.constant 0 : index
    %19 = vector.load %arg5[%c0_10, %c0_11] : memref<40x32xf32, #tpu.memory_space<vmem>>, vector<40x32xf32>
    %cst_12 = arith.constant dense<0.000000e+00> : vector<8x32xf32>
    %20 = tpu.matmul %15, %19, %cst_12 {dimension_numbers = #tpu.dot_dimension_numbers<[1], [0], [0], [1], [0, 0, 1, 1], [], []>} : vector<8x40xf32>, vector<40x32xf32>, vector<8x32xf32> -> vector<8x32xf32>
    %c0_13 = arith.constant 0 : index
    %c0_14 = arith.constant 0 : index
    %21 = vector.load %arg6[%c0_13, %c0_14] : memref<40x32xf32, #tpu.memory_space<vmem>>, vector<40x32xf32>
    %cst_15 = arith.constant dense<0.000000e+00> : vector<8x32xf32>
    %22 = tpu.matmul %17, %21, %cst_15 {dimension_numbers = #tpu.dot_dimension_numbers<[1], [0], [0], [1], [0, 0, 1, 1], [], []>} : vector<8x40xf32>, vector<40x32xf32>, vector<8x32xf32> -> vector<8x32xf32>
    %23 = arith.addf %20, %22 : vector<8x32xf32>
    %c0_16 = arith.constant 0 : index
    %c0_17 = arith.constant 0 : index
    %24 = vector.load %arg7[%c0_16, %c0_17] : memref<1x32xf32, #tpu.memory_space<vmem>>, vector<1x32xf32>
    %25 = vector.broadcast %24 : vector<1x32xf32> to vector<8x32xf32>
    %26 = arith.addf %23, %25 : vector<8x32xf32>
    %cst_18 = arith.constant 0.000000e+00 : f32
    %27 = vector.broadcast %cst_18 : f32 to vector<8x32xf32>
    %28 = arith.maximumf %26, %27 : vector<8x32xf32>
    %c0_19 = arith.constant 0 : index
    %c0_20 = arith.constant 0 : index
    %29 = vector.load %arg8[%c0_19, %c0_20] : memref<32x16xf32, #tpu.memory_space<vmem>>, vector<32x16xf32>
    %cst_21 = arith.constant dense<0.000000e+00> : vector<8x16xf32>
    %30 = tpu.matmul %28, %29, %cst_21 {dimension_numbers = #tpu.dot_dimension_numbers<[1], [0], [0], [1], [0, 0, 1, 1], [], []>} : vector<8x32xf32>, vector<32x16xf32>, vector<8x16xf32> -> vector<8x16xf32>
    %c0_22 = arith.constant 0 : index
    %c0_23 = arith.constant 0 : index
    %31 = vector.load %arg9[%c0_22, %c0_23] : memref<1x16xf32, #tpu.memory_space<vmem>>, vector<1x16xf32>
    %32 = vector.broadcast %31 : vector<1x16xf32> to vector<8x16xf32>
    %33 = arith.addf %30, %32 : vector<8x16xf32>
    %cst_24 = arith.constant 0.000000e+00 : f32
    %34 = vector.broadcast %cst_24 : f32 to vector<8x16xf32>
    %35 = arith.maximumf %33, %34 : vector<8x16xf32>
    %c0_25 = arith.constant 0 : index
    %c0_26 = arith.constant 0 : index
    %36 = vector.load %arg10[%c0_25, %c0_26] : memref<16x8xf32, #tpu.memory_space<vmem>>, vector<16x8xf32>
    %cst_27 = arith.constant dense<0.000000e+00> : vector<8x8xf32>
    %37 = tpu.matmul %35, %36, %cst_27 {dimension_numbers = #tpu.dot_dimension_numbers<[1], [0], [0], [1], [0, 0, 1, 1], [], []>} : vector<8x16xf32>, vector<16x8xf32>, vector<8x8xf32> -> vector<8x8xf32>
    %c0_28 = arith.constant 0 : index
    %c0_29 = arith.constant 0 : index
    %38 = vector.load %arg11[%c0_28, %c0_29] : memref<1x8xf32, #tpu.memory_space<vmem>>, vector<1x8xf32>
    %39 = vector.broadcast %38 : vector<1x8xf32> to vector<8x8xf32>
    %40 = arith.addf %37, %39 : vector<8x8xf32>
    %cst_30 = arith.constant 0.000000e+00 : f32
    %41 = vector.broadcast %cst_30 : f32 to vector<8x8xf32>
    %42 = arith.maximumf %40, %41 : vector<8x8xf32>
    %c0_31 = arith.constant 0 : index
    %c0_32 = arith.constant 0 : index
    %43 = vector.load %arg12[%c0_31, %c0_32] : memref<1x40xf32, #tpu.memory_space<vmem>>, vector<1x40xf32>
    %44 = vector.broadcast %43 : vector<1x40xf32> to vector<8x40xf32>
    %45 = arith.mulf %18, %44 : vector<8x40xf32>
    %cst_33 = arith.constant dense<0.000000e+00> : vector<8xf32>
    %46 = vector.multi_reduction <add>, %45, %cst_33 [1] : vector<8x40xf32> to vector<8xf32>
    %c0_34 = arith.constant 0 : index
    %c0_35 = arith.constant 0 : index
    %47 = vector.load %arg13[%c0_34, %c0_35] : memref<1x8xf32, #tpu.memory_space<vmem>>, vector<1x8xf32>
    %48 = vector.broadcast %47 : vector<1x8xf32> to vector<8x8xf32>
    %49 = arith.mulf %42, %48 : vector<8x8xf32>
    %cst_36 = arith.constant dense<0.000000e+00> : vector<8xf32>
    %50 = vector.multi_reduction <add>, %49, %cst_36 [1] : vector<8x8xf32> to vector<8xf32>
    %51 = arith.addf %46, %50 : vector<8xf32>
    %52 = vector.shape_cast %51 : vector<8xf32> to vector<1x8xf32>
    %c0_37 = arith.constant 0 : index
    %c0_38 = arith.constant 0 : index
    %53 = vector.load %arg14[%c0_37, %c0_38] : memref<1x1xf32, #tpu.memory_space<vmem>>, vector<1x1xf32>
    %54 = vector.broadcast %53 : vector<1x1xf32> to vector<1x8xf32>
    %55 = arith.addf %52, %54 : vector<1x8xf32>
    %c0_39 = arith.constant 0 : index
    %c0_40 = arith.constant 0 : index
    %c0_41 = arith.constant 0 : index
    %56 = vector.load %arg15[%c0_39, %c0_40, %c0_41] : memref<1x1x8xf32, #tpu.memory_space<vmem>>, vector<1x1x8xf32>
    %57 = vector.shape_cast %56 : vector<1x1x8xf32> to vector<1x8xf32>
    %58 = vector.shape_cast %55 : vector<1x8xf32> to vector<1x1x8xf32>
    tpu.vector_store %arg15[%c0_39, %c0_40, %c0_41], %58 {strides = array<i32>} : memref<1x1x8xf32, #tpu.memory_space<vmem>>, vector<1x1x8xf32>,
    return
  }
  func.func @transform_0(%arg0: i32) -> (i32, i32, i32) {
    %c0_i32 = arith.constant 0 : i32
    %c0_i32_0 = arith.constant 0 : i32
    %c0_i32_1 = arith.constant 0 : i32
    return %arg0, %c0_i32, %c0_i32_0 : i32, i32, i32
  }
  func.func @transform_1(%arg0: i32) -> (i32, i32, i32) {
    %c0_i32 = arith.constant 0 : i32
    %c0_i32_0 = arith.constant 0 : i32
    %c0_i32_1 = arith.constant 0 : i32
    return %arg0, %c0_i32, %c0_i32_0 : i32, i32, i32
  }
  func.func @transform_2(%arg0: i32) -> (i32, i32) {
    %c0_i32 = arith.constant 0 : i32
    %c0_i32_0 = arith.constant 0 : i32
    %c0_i32_1 = arith.constant 0 : i32
    return %c0_i32, %c0_i32_0 : i32, i32
  }
  func.func @transform_3(%arg0: i32) -> (i32, i32) {
    %c0_i32 = arith.constant 0 : i32
    %c0_i32_0 = arith.constant 0 : i32
    %c0_i32_1 = arith.constant 0 : i32
    return %c0_i32, %c0_i32_0 : i32, i32
  }
  func.func @transform_4(%arg0: i32) -> (i32, i32) {
    %c0_i32 = arith.constant 0 : i32
    %c0_i32_0 = arith.constant 0 : i32
    %c0_i32_1 = arith.constant 0 : i32
    return %c0_i32, %c0_i32_0 : i32, i32
  }
  func.func @transform_5(%arg0: i32) -> (i32, i32) {
    %c0_i32 = arith.constant 0 : i32
    %c0_i32_0 = arith.constant 0 : i32
    %c0_i32_1 = arith.constant 0 : i32
    return %c0_i32, %c0_i32_0 : i32, i32
  }
  func.func @transform_6(%arg0: i32) -> (i32, i32) {
    %c0_i32 = arith.constant 0 : i32
    %c0_i32_0 = arith.constant 0 : i32
    %c0_i32_1 = arith.constant 0 : i32
    return %c0_i32, %c0_i32_0 : i32, i32
  }
  func.func @transform_7(%arg0: i32) -> (i32, i32) {
    %c0_i32 = arith.constant 0 : i32
    %c0_i32_0 = arith.constant 0 : i32
    %c0_i32_1 = arith.constant 0 : i32
    return %c0_i32, %c0_i32_0 : i32, i32
  }
  func.func @transform_8(%arg0: i32) -> (i32, i32) {
    %c0_i32 = arith.constant 0 : i32
    %c0_i32_0 = arith.constant 0 : i32
    %c0_i32_1 = arith.constant 0 : i32
    return %c0_i32, %c0_i32_0 : i32, i32
  }
  func.func @transform_9(%arg0: i32) -> (i32, i32) {
    %c0_i32 = arith.constant 0 : i32
    %c0_i32_0 = arith.constant 0 : i32
    %c0_i32_1 = arith.constant 0 : i32
    return %c0_i32, %c0_i32_0 : i32, i32
  }
  func.func @transform_10(%arg0: i32) -> (i32, i32) {
    %c0_i32 = arith.constant 0 : i32
    %c0_i32_0 = arith.constant 0 : i32
    %c0_i32_1 = arith.constant 0 : i32
    return %c0_i32, %c0_i32_0 : i32, i32
  }
  func.func @transform_11(%arg0: i32) -> (i32, i32) {
    %c0_i32 = arith.constant 0 : i32
    %c0_i32_0 = arith.constant 0 : i32
    %c0_i32_1 = arith.constant 0 : i32
    return %c0_i32, %c0_i32_0 : i32, i32
  }
  func.func @transform_12(%arg0: i32) -> (i32, i32) {
    %c0_i32 = arith.constant 0 : i32
    %c0_i32_0 = arith.constant 0 : i32
    %c0_i32_1 = arith.constant 0 : i32
    return %c0_i32, %c0_i32_0 : i32, i32
  }
  func.func @transform_13(%arg0: i32) -> (i32, i32) {
    %c0_i32 = arith.constant 0 : i32
    %c0_i32_0 = arith.constant 0 : i32
    %c0_i32_1 = arith.constant 0 : i32
    return %c0_i32, %c0_i32_0 : i32, i32
  }
  func.func @transform_14(%arg0: i32) -> (i32, i32, i32) {
    %c0_i32 = arith.constant 0 : i32
    %c0_i32_0 = arith.constant 0 : i32
    %c0_i32_1 = arith.constant 0 : i32
    return %arg0, %c0_i32, %c0_i32_0 : i32, i32, i32
  }
}

</mosaic_0001>

<llo_original>
// kernel: tpu_custom_call.1
$region0: #{tpu_custom_call.1}
  #allocation0 [shape = 'u32[]', space=smem, size = 0x4, offset = 0x4, fixed_abs, tag = 'smem constant byte address 0x4 - core index']
  #allocation1 [shape = 'u32[144,128]{1,0:T(1,128)}', space=vmem, size = 0x12000, scoped, tag = 'internal scratch']
  #allocation2 [shape = 'f32[1,1]{1,0:T(1,128)S(1)}', space=vmem, size = 0x200, scoped, tag = 'scoped memory for tpu_custom_call.1']
  %s0 = inlined_call_operand.vmem [shape: s32[1,8,1], index: 0, kind: input, shape index: {}]
  %s1 = inlined_call_operand.vmem [shape: s32[1,8,1], index: 1, kind: input, shape index: {}]
  %s2 = inlined_call_operand.vmem [shape: f32[32,40], index: 2, kind: input, shape index: {}]
  %s3 = inlined_call_operand.vmem [shape: f32[48,40], index: 3, kind: input, shape index: {}]
  %s4 = inlined_call_operand.vmem [shape: f32[40,32], index: 4, kind: input, shape index: {}]
  %s5 = inlined_call_operand.vmem [shape: f32[40,32], index: 5, kind: input, shape index: {}]
  %s6 = inlined_call_operand.vmem [shape: f32[1,32], index: 6, kind: input, shape index: {}]
  %s7 = inlined_call_operand.vmem [shape: f32[32,16], index: 7, kind: input, shape index: {}]
  %s8 = inlined_call_operand.vmem [shape: f32[1,16], index: 8, kind: input, shape index: {}]
  %s9 = inlined_call_operand.vmem [shape: f32[16,8], index: 9, kind: input, shape index: {}]
  %s10 = inlined_call_operand.vmem [shape: f32[1,8], index: 10, kind: input, shape index: {}]
  %s11 = inlined_call_operand.vmem [shape: f32[1,40], index: 11, kind: input, shape index: {}]
  %s12 = inlined_call_operand.vmem [shape: f32[1,8], index: 12, kind: input, shape index: {}]
  %s13 = inlined_call_operand.<no memory space> [shape: f32[1,1], index: 13, kind: input, shape index: {}]
  %s14 = inlined_call_operand.hbm [shape: f32[1,1,8], index: 14, kind: output, shape index: {}]
  %s15 = sld [smem:[#allocation0]]
  $region66: #{tpu_custom_call.1} parent=0
    _
  %s17 = ssub.s32 1, %s15
  %s18 = scalar_select 0, %s17, %s15
  %v19 = vstv %s13
  %20 = vst [vmem:[#allocation2] sm:$0x1] %v19
  $region1: #{tpu_custom_call.1} parent=0
    #allocation3 [shape = 'u8[512]{0}', space=vmem, size = 0x400, scoped, tag = 'output window, operand 0, single buffered']
    #allocation4 [shape = 's32[1]{0}', space=sflag, size = 0x4, scoped, tag = 'scoped memory for tpu_custom_call.1']
    %21 = vsyncpa [#allocation4], 0
    // Predicated region
    $region2: #{tpu_custom_call.1} parent=1 // pred_check
      _
    $region3: #{tpu_custom_call.1} parent=1 // pred_check_branch
      %23 = sbr.rel (0) target = $region5
    $region4: #{tpu_custom_call.1} parent=1 // pred_region
      _
    $region5: #{tpu_custom_call.1} parent=1 // pred_fallthru
      _
    // Predicated region
    $region6: #{tpu_custom_call.1} parent=1 // pred_check
      _
    $region7: #{tpu_custom_call.1} parent=1 // pred_check_branch
      %25 = sbr.rel (0) target = $region9
    $region8: #{tpu_custom_call.1} parent=1 // pred_region
      _
    $region9: #{tpu_custom_call.1} parent=1 // pred_fallthru
      _
    // Predicated region
    $region10: #{tpu_custom_call.1} parent=1 // pred_check
      _
    $region11: #{tpu_custom_call.1} parent=1 // pred_check_branch
      %27 = sbr.rel (0) target = $region13
    $region12: #{tpu_custom_call.1} parent=1 // pred_region
      _
    $region13: #{tpu_custom_call.1} parent=1 // pred_fallthru
      _
    // Predicated region
    $region14: #{tpu_custom_call.1} parent=1 // pred_check
      _
    $region15: #{tpu_custom_call.1} parent=1 // pred_check_branch
      %29 = sbr.rel (0) target = $region17
    $region16: #{tpu_custom_call.1} parent=1 // pred_region
      _
    $region17: #{tpu_custom_call.1} parent=1 // pred_fallthru
      _
    // Predicated region
    $region18: #{tpu_custom_call.1} parent=1 // pred_check
      _
    $region19: #{tpu_custom_call.1} parent=1 // pred_check_branch
      %31 = sbr.rel (0) target = $region21
    $region20: #{tpu_custom_call.1} parent=1 // pred_region
      _
    $region21: #{tpu_custom_call.1} parent=1 // pred_fallthru
      _
    // Predicated region
    $region22: #{tpu_custom_call.1} parent=1 // pred_check
      _
    $region23: #{tpu_custom_call.1} parent=1 // pred_check_branch
      %33 = sbr.rel (0) target = $region25
    $region24: #{tpu_custom_call.1} parent=1 // pred_region
      _
    $region25: #{tpu_custom_call.1} parent=1 // pred_fallthru
      _
    // Predicated region
    $region26: #{tpu_custom_call.1} parent=1 // pred_check
      _
    $region27: #{tpu_custom_call.1} parent=1 // pred_check_branch
      %35 = sbr.rel (0) target = $region29
    $region28: #{tpu_custom_call.1} parent=1 // pred_region
      _
    $region29: #{tpu_custom_call.1} parent=1 // pred_fallthru
      _
    // Predicated region
    $region30: #{tpu_custom_call.1} parent=1 // pred_check
      _
    $region31: #{tpu_custom_call.1} parent=1 // pred_check_branch
      %37 = sbr.rel (0) target = $region33
    $region32: #{tpu_custom_call.1} parent=1 // pred_region
      _
    $region33: #{tpu_custom_call.1} parent=1 // pred_fallthru
      _
    // Predicated region
    $region34: #{tpu_custom_call.1} parent=1 // pred_check
      _
    $region35: #{tpu_custom_call.1} parent=1 // pred_check_branch
      %39 = sbr.rel (0) target = $region37
    $region36: #{tpu_custom_call.1} parent=1 // pred_region
      _
    $region37: #{tpu_custom_call.1} parent=1 // pred_fallthru
      _
    // Predicated region
    $region38: #{tpu_custom_call.1} parent=1 // pred_check
      _
    $region39: #{tpu_custom_call.1} parent=1 // pred_check_branch
      %41 = sbr.rel (0) target = $region41
    $region40: #{tpu_custom_call.1} parent=1 // pred_region
      _
    $region41: #{tpu_custom_call.1} parent=1 // pred_fallthru
      _
    // Predicated region
    $region42: #{tpu_custom_call.1} parent=1 // pred_check
      _
    $region43: #{tpu_custom_call.1} parent=1 // pred_check_branch
      %43 = sbr.rel (0) target = $region45
    $region44: #{tpu_custom_call.1} parent=1 // pred_region
      _
    $region45: #{tpu_custom_call.1} parent=1 // pred_fallthru
      _
    // Predicated region
    $region46: #{tpu_custom_call.1} parent=1 // pred_check
      _
    $region47: #{tpu_custom_call.1} parent=1 // pred_check_branch
      %45 = sbr.rel (0) target = $region49
    $region48: #{tpu_custom_call.1} parent=1 // pred_region
      _
    $region49: #{tpu_custom_call.1} parent=1 // pred_fallthru
      _
    // Predicated region
    $region50: #{tpu_custom_call.1} parent=1 // pred_check
      _
    $region51: #{tpu_custom_call.1} parent=1 // pred_check_branch
      %47 = sbr.rel (0) target = $region53
    $region52: #{tpu_custom_call.1} parent=1 // pred_region
      _
    $region53: #{tpu_custom_call.1} parent=1 // pred_fallthru
      _
    // Predicated region
    $region54: #{tpu_custom_call.1} parent=1 // pred_check
      _
    $region55: #{tpu_custom_call.1} parent=1 // pred_check_branch
      %49 = sbr.rel (0) target = $region57
    $region56: #{tpu_custom_call.1} parent=1 // pred_region
      _
    $region57: #{tpu_custom_call.1} parent=1 // pred_fallthru
      _
    %v50 = vld [vmem:[%s0] sm:$0xff]
    %v51 = vld [vmem:[%s1] sm:$0xff]
    %v52 = vlaneseq
    %v53 = vand.u32 %v52, 127
    %54 = vset.pattern.permute.xlu0 0
    %55 = vperm.xlu0 %54, %v50
    %v56 = vpop.permute.xlu0 %55
    %vm57 = vcmp.eq.s32.totalorder %v56, %v53
    %v58 = vsel %vm57, 1, 0
    %v59 = vcvt.s32.f32 %v58
    %60 = vset.pattern.permute.xlu0 0
    %61 = vperm.xlu0 %60, %v51
    %v62 = vpop.permute.xlu0 %61
    %vm63 = vcmp.eq.s32.totalorder %v62, %v53
    %v64 = vsel %vm63, 1, 0
    %v65 = vcvt.s32.f32 %v64
    %v66 = vld [vmem:[%s2] sm:$0xff]
    %v67 = vld [vmem:[%s2 + $0x8] sm:$0xff]
    %v68 = vld [vmem:[%s2 + $0x10] sm:$0xff]
    %v69 = vld [vmem:[%s2 + $0x18] sm:$0xff]
    %vm70 = vcmask 261120
    %v72 = vsel %vm70, %v59, 0
    %74 = vmatprep.subr.mxu0 0.0
    %75 = vmatpush1.msra.mxu0 %v66
    %76 = vmatprep.subr.mxu0 0.0
    %77 = vmatpush1.msra.mxu0 %v67
    %78 = vmatprep.subr.mxu0 0.0
    %79 = vmatpush1.msra.mxu0 %v68
    %80 = vmatprep.subr.mxu0 0.0
    %81 = vmatpush1.msra.mxu0 %v69
    %82 = vmatprep.subr.mxu0 0.0
    %83 = vmatpush1.msra.mxu0 0.0
    %84 = vmatprep.subr.mxu0 0.0
    %85 = vmatpush1.msra.mxu0 0.0
    %86 = vmatprep.subr.mxu0 0.0
    %87 = vmatpush1.msra.mxu0 0.0
    %88 = vmatprep.subr.mxu0 0.0
    %89 = vmatpush1.msra.mxu0 0.0
    %90 = vmatprep.subr.mxu0 0.0
    %91 = vmatpush1.msra.mxu0 0.0
    %92 = vmatprep.subr.mxu0 0.0
    %93 = vmatpush1.msra.mxu0 0.0
    %94 = vmatprep.subr.mxu0 0.0
    %95 = vmatpush1.msra.mxu0 0.0
    %96 = vmatprep.subr.mxu0 0.0
    %97 = vmatpush1.msra.mxu0 0.0
    %98 = vmatprep.subr.mxu0 0.0
    %99 = vmatpush1.msra.mxu0 0.0
    %100 = vmatprep.subr.mxu0 0.0
    %101 = vmatpush1.msra.mxu0 0.0
    %102 = vmatprep.subr.mxu0 0.0
    %103 = vmatpush1.msra.mxu0 0.0
    %104 = vmatprep.subr.mxu0 0.0
    %105 = vmatpush1.msra.mxu0 0.0
    %106 = vmatprep.subr.mxu0 0.0
    %107 = vmatpush1.msra.mxu0 0.0
    %108 = vmatprep.subr.mxu0 0.0
    %109 = vmatpush1.msra.mxu0 0.0
    %110 = vmatprep.subr.mxu0 0.0
    %111 = vmatpush1.msra.mxu0 0.0
    %112 = vmatprep.subr.mxu0 0.0
    %113 = vmatpush1.msra.mxu0 0.0
    %114 = vmatprep.subr.mxu0 0.0
    %115 = vmatpush1.msra.mxu0 0.0
    %116 = vmatprep.subr.mxu0 0.0
    %117 = vmatpush1.msra.mxu0 0.0
    %118 = vmatprep.subr.mxu0 0.0
    %119 = vmatpush1.msra.mxu0 0.0
    %120 = vmatprep.subr.mxu0 0.0
    %121 = vmatpush1.msra.mxu0 0.0
    %122 = vmatprep.subr.mxu0 0.0
    %123 = vmatpush1.msra.mxu0 0.0
    %124 = vmatprep.subr.mxu0 0.0
    %125 = vmatpush1.msra.mxu0 0.0
    %126 = vmatprep.subr.mxu0 0.0
    %127 = vmatpush1.msra.mxu0 0.0
    %128 = vmatprep.subr.mxu0 0.0
    %129 = vmatpush1.msra.mxu0 0.0
    %130 = vmatprep.subr.mxu0 0.0
    %131 = vmatpush1.msra.mxu0 0.0
    %132 = vmatprep.subr.mxu0 0.0
    %133 = vmatpush1.msra.mxu0 0.0
    %134 = vmatprep.subr.mxu0 0.0
    %135 = vmatpush1.msra.mxu0 0.0
    %136 = vmatprep.subr.mxu0 0.0
    %137 = vmatpush1.msra.mxu0 0.0
    %138 = vmatprep.mubr.f32.mxu0 0.0
    %139 = vmatmul.mubr.f32.gmra.mrb[0].mxu0 %v72
    %v140 = vpop.f32.mrb[0].mxu0
    %v141 = vadd.f32 0.0, %v140
    %v142 = vpop.f32.mrb[0].mxu0
    %143 = vdwg.mxu0
    %v144 = vld [vmem:[%s3] sm:$0xff]
    %v145 = vld [vmem:[%s3 + $0x8] sm:$0xff]
    %v146 = vld [vmem:[%s3 + $0x10] sm:$0xff]
    %v147 = vld [vmem:[%s3 + $0x18] sm:$0xff]
    %v148 = vld [vmem:[%s3 + $0x20] sm:$0xff]
    %v149 = vld [vmem:[%s3 + $0x28] sm:$0xff]
    %vm150 = vcmask 392192
    %v152 = vsel %vm150, %v65, 0
    %154 = vmatprep.subr.mxu0 0.0
    %155 = vmatpush1.msra.mxu0 %v144
    %156 = vmatprep.subr.mxu0 0.0
    %157 = vmatpush1.msra.mxu0 %v145
    %158 = vmatprep.subr.mxu0 0.0
    %159 = vmatpush1.msra.mxu0 %v146
    %160 = vmatprep.subr.mxu0 0.0
    %161 = vmatpush1.msra.mxu0 %v147
    %162 = vmatprep.subr.mxu0 0.0
    %163 = vmatpush1.msra.mxu0 %v148
    %164 = vmatprep.subr.mxu0 0.0
    %165 = vmatpush1.msra.mxu0 %v149
    %166 = vmatprep.subr.mxu0 0.0
    %167 = vmatpush1.msra.mxu0 0.0
    %168 = vmatprep.subr.mxu0 0.0
    %169 = vmatpush1.msra.mxu0 0.0
    %170 = vmatprep.subr.mxu0 0.0
    %171 = vmatpush1.msra.mxu0 0.0
    %172 = vmatprep.subr.mxu0 0.0
    %173 = vmatpush1.msra.mxu0 0.0
    %174 = vmatprep.subr.mxu0 0.0
    %175 = vmatpush1.msra.mxu0 0.0
    %176 = vmatprep.subr.mxu0 0.0
    %177 = vmatpush1.msra.mxu0 0.0
    %178 = vmatprep.subr.mxu0 0.0
    %179 = vmatpush1.msra.mxu0 0.0
    %180 = vmatprep.subr.mxu0 0.0
    %181 = vmatpush1.msra.mxu0 0.0
    %182 = vmatprep.subr.mxu0 0.0
    %183 = vmatpush1.msra.mxu0 0.0
    %184 = vmatprep.subr.mxu0 0.0
    %185 = vmatpush1.msra.mxu0 0.0
    %186 = vmatprep.subr.mxu0 0.0
    %187 = vmatpush1.msra.mxu0 0.0
    %188 = vmatprep.subr.mxu0 0.0
    %189 = vmatpush1.msra.mxu0 0.0
    %190 = vmatprep.subr.mxu0 0.0
    %191 = vmatpush1.msra.mxu0 0.0
    %192 = vmatprep.subr.mxu0 0.0
    %193 = vmatpush1.msra.mxu0 0.0
    %194 = vmatprep.subr.mxu0 0.0
    %195 = vmatpush1.msra.mxu0 0.0
    %196 = vmatprep.subr.mxu0 0.0
    %197 = vmatpush1.msra.mxu0 0.0
    %198 = vmatprep.subr.mxu0 0.0
    %199 = vmatpush1.msra.mxu0 0.0
    %200 = vmatprep.subr.mxu0 0.0
    %201 = vmatpush1.msra.mxu0 0.0
    %202 = vmatprep.subr.mxu0 0.0
    %203 = vmatpush1.msra.mxu0 0.0
    %204 = vmatprep.subr.mxu0 0.0
    %205 = vmatpush1.msra.mxu0 0.0
    %206 = vmatprep.subr.mxu0 0.0
    %207 = vmatpush1.msra.mxu0 0.0
    %208 = vmatprep.subr.mxu0 0.0
    %209 = vmatpush1.msra.mxu0 0.0
    %210 = vmatprep.subr.mxu0 0.0
    %211 = vmatpush1.msra.mxu0 0.0
    %212 = vmatprep.subr.mxu0 0.0
    %213 = vmatpush1.msra.mxu0 0.0
    %214 = vmatprep.subr.mxu0 0.0
    %215 = vmatpush1.msra.mxu0 0.0
    %216 = vmatprep.subr.mxu0 0.0
    %217 = vmatpush1.msra.mxu0 0.0
    %218 = vmatprep.mubr.f32.mxu0 0.0
    %219 = vmatmul.mubr.f32.gmra.mrb[0].mxu0 %v152
    %v220 = vpop.f32.mrb[0].mxu0
    %v221 = vadd.f32 0.0, %v220
    %v222 = vpop.f32.mrb[0].mxu0
    %223 = vdwg.mxu0
    %v224 = vmul.f32 %v141, %v221
    %v225 = vld [vmem:[%s4] sm:$0xff]
    %v226 = vld [vmem:[%s4 + $0x8] sm:$0xff]
    %v227 = vld [vmem:[%s4 + $0x10] sm:$0xff]
    %v228 = vld [vmem:[%s4 + $0x18] sm:$0xff]
    %v229 = vld [vmem:[%s4 + $0x20] sm:$0xff]
    %v230 = vld [vmem:[%s5] sm:$0xff]
    %v231 = vld [vmem:[%s5 + $0x8] sm:$0xff]
    %v232 = vld [vmem:[%s5 + $0x10] sm:$0xff]
    %v233 = vld [vmem:[%s5 + $0x18] sm:$0xff]
    %v234 = vld [vmem:[%s5 + $0x20] sm:$0xff]
    %vm235 = vcmask 326656
    %v237 = vsel %vm235, %v221, 0
    %239 = vmatprep.subr.mxu0 0.0
    %240 = vmatpush1.msra.mxu0 %v230
    %241 = vmatprep.subr.mxu0 0.0
    %242 = vmatpush1.msra.mxu0 %v231
    %243 = vmatprep.subr.mxu0 0.0
    %244 = vmatpush1.msra.mxu0 %v232
    %245 = vmatprep.subr.mxu0 0.0
    %246 = vmatpush1.msra.mxu0 %v233
    %247 = vmatprep.subr.mxu0 0.0
    %248 = vmatpush1.msra.mxu0 %v234
    %249 = vmatprep.subr.mxu0 0.0
    %250 = vmatpush1.msra.mxu0 0.0
    %251 = vmatprep.subr.mxu0 0.0
    %252 = vmatpush1.msra.mxu0 0.0
    %253 = vmatprep.subr.mxu0 0.0
    %254 = vmatpush1.msra.mxu0 0.0
    %255 = vmatprep.subr.mxu0 0.0
    %256 = vmatpush1.msra.mxu0 0.0
    %257 = vmatprep.subr.mxu0 0.0
    %258 = vmatpush1.msra.mxu0 0.0
    %259 = vmatprep.subr.mxu0 0.0
    %260 = vmatpush1.msra.mxu0 0.0
    %261 = vmatprep.subr.mxu0 0.0
    %262 = vmatpush1.msra.mxu0 0.0
    %263 = vmatprep.subr.mxu0 0.0
    %264 = vmatpush1.msra.mxu0 0.0
    %265 = vmatprep.subr.mxu0 0.0
    %266 = vmatpush1.msra.mxu0 0.0
    %267 = vmatprep.subr.mxu0 0.0
    %268 = vmatpush1.msra.mxu0 0.0
    %269 = vmatprep.subr.mxu0 0.0
    %270 = vmatpush1.msra.mxu0 0.0
    %271 = vmatprep.subr.mxu0 0.0
    %272 = vmatpush1.msra.mxu0 0.0
    %273 = vmatprep.subr.mxu0 0.0
    %274 = vmatpush1.msra.mxu0 0.0
    %275 = vmatprep.subr.mxu0 0.0
    %276 = vmatpush1.msra.mxu0 0.0
    %277 = vmatprep.subr.mxu0 0.0
    %278 = vmatpush1.msra.mxu0 0.0
    %279 = vmatprep.subr.mxu0 0.0
    %280 = vmatpush1.msra.mxu0 0.0
    %281 = vmatprep.subr.mxu0 0.0
    %282 = vmatpush1.msra.mxu0 0.0
    %283 = vmatprep.subr.mxu0 0.0
    %284 = vmatpush1.msra.mxu0 0.0
    %285 = vmatprep.subr.mxu0 0.0
    %286 = vmatpush1.msra.mxu0 0.0
    %287 = vmatprep.subr.mxu0 0.0
    %288 = vmatpush1.msra.mxu0 0.0
    %289 = vmatprep.subr.mxu0 0.0
    %290 = vmatpush1.msra.mxu0 0.0
    %291 = vmatprep.subr.mxu0 0.0
    %292 = vmatpush1.msra.mxu0 0.0
    %293 = vmatprep.subr.mxu0 0.0
    %294 = vmatpush1.msra.mxu0 0.0
    %295 = vmatprep.subr.mxu0 0.0
    %296 = vmatpush1.msra.mxu0 0.0
    %297 = vmatprep.subr.mxu0 0.0
    %298 = vmatpush1.msra.mxu0 0.0
    %299 = vmatprep.subr.mxu0 0.0
    %300 = vmatpush1.msra.mxu0 0.0
    %301 = vmatprep.subr.mxu0 0.0
    %302 = vmatpush1.msra.mxu0 0.0
    %303 = vmatprep.mubr.f32.mxu0 0.0
    %304 = vmatmul.mubr.f32.gmra.mrb[0].mxu0 %v237
    %v305 = vpop.f32.mrb[0].mxu0
    %v306 = vadd.f32 0.0, %v305
    %v307 = vpop.f32.mrb[0].mxu0
    %308 = vdwg.mxu0
    %v310 = vsel %vm235, %v141, 0
    %312 = vmatprep.subr.mxu0 0.0
    %313 = vmatpush1.msra.mxu0 %v225
    %314 = vmatprep.subr.mxu0 0.0
    %315 = vmatpush1.msra.mxu0 %v226
    %316 = vmatprep.subr.mxu0 0.0
    %317 = vmatpush1.msra.mxu0 %v227
    %318 = vmatprep.subr.mxu0 0.0
    %319 = vmatpush1.msra.mxu0 %v228
    %320 = vmatprep.subr.mxu0 0.0
    %321 = vmatpush1.msra.mxu0 %v229
    %322 = vmatprep.subr.mxu0 0.0
    %323 = vmatpush1.msra.mxu0 0.0
    %324 = vmatprep.subr.mxu0 0.0
    %325 = vmatpush1.msra.mxu0 0.0
    %326 = vmatprep.subr.mxu0 0.0
    %327 = vmatpush1.msra.mxu0 0.0
    %328 = vmatprep.subr.mxu0 0.0
    %329 = vmatpush1.msra.mxu0 0.0
    %330 = vmatprep.subr.mxu0 0.0
    %331 = vmatpush1.msra.mxu0 0.0
    %332 = vmatprep.subr.mxu0 0.0
    %333 = vmatpush1.msra.mxu0 0.0
    %334 = vmatprep.subr.mxu0 0.0
    %335 = vmatpush1.msra.mxu0 0.0
    %336 = vmatprep.subr.mxu0 0.0
    %337 = vmatpush1.msra.mxu0 0.0
    %338 = vmatprep.subr.mxu0 0.0
    %339 = vmatpush1.msra.mxu0 0.0
    %340 = vmatprep.subr.mxu0 0.0
    %341 = vmatpush1.msra.mxu0 0.0
    %342 = vmatprep.subr.mxu0 0.0
    %343 = vmatpush1.msra.mxu0 0.0
    %344 = vmatprep.subr.mxu0 0.0
    %345 = vmatpush1.msra.mxu0 0.0
    %346 = vmatprep.subr.mxu0 0.0
    %347 = vmatpush1.msra.mxu0 0.0
    %348 = vmatprep.subr.mxu0 0.0
    %349 = vmatpush1.msra.mxu0 0.0
    %350 = vmatprep.subr.mxu0 0.0
    %351 = vmatpush1.msra.mxu0 0.0
    %352 = vmatprep.subr.mxu0 0.0
    %353 = vmatpush1.msra.mxu0 0.0
    %354 = vmatprep.subr.mxu0 0.0
    %355 = vmatpush1.msra.mxu0 0.0
    %356 = vmatprep.subr.mxu0 0.0
    %357 = vmatpush1.msra.mxu0 0.0
    %358 = vmatprep.subr.mxu0 0.0
    %359 = vmatpush1.msra.mxu0 0.0
    %360 = vmatprep.subr.mxu0 0.0
    %361 = vmatpush1.msra.mxu0 0.0
    %362 = vmatprep.subr.mxu0 0.0
    %363 = vmatpush1.msra.mxu0 0.0
    %364 = vmatprep.subr.mxu0 0.0
    %365 = vmatpush1.msra.mxu0 0.0
    %366 = vmatprep.subr.mxu0 0.0
    %367 = vmatpush1.msra.mxu0 0.0
    %368 = vmatprep.subr.mxu0 0.0
    %369 = vmatpush1.msra.mxu0 0.0
    %370 = vmatprep.subr.mxu0 0.0
    %371 = vmatpush1.msra.mxu0 0.0
    %372 = vmatprep.subr.mxu0 0.0
    %373 = vmatpush1.msra.mxu0 0.0
    %374 = vmatprep.subr.mxu0 0.0
    %375 = vmatpush1.msra.mxu0 0.0
    %376 = vmatprep.mubr.f32.mxu0 0.0
    %377 = vmatmul.mubr.f32.gmra.mrb[0].mxu0 %v310
    %v378 = vpop.f32.mrb[0].mxu0
    %v379 = vadd.f32 %v306, %v378
    %v380 = vpop.f32.mrb[0].mxu0
    %381 = vdwg.mxu0
    %v382 = vld [vmem:[%s6] sm:$0x1]
    %v384 = vlaneseq
    %v385 = vshrl.u32 %v384, 7
    %v386 = vsub.s32 0, %v385
    %v387 = vrot.slane %v382, %v386
    %v389 = vadd.f32 %v379, %v387
    %v390 = vmax.f32 %v389, 0.0
    %v391 = vld [vmem:[%s7] sm:$0xff]
    %v392 = vld [vmem:[%s7 + $0x8] sm:$0xff]
    %v393 = vld [vmem:[%s7 + $0x10] sm:$0xff]
    %v394 = vld [vmem:[%s7 + $0x18] sm:$0xff]
    %v395 = vld [vmem:[%s8] sm:$0x1]
    %v397 = vlaneseq
    %v398 = vshrl.u32 %v397, 7
    %v399 = vsub.s32 0, %v398
    %v400 = vrot.slane %v395, %v399
    %v403 = vsel %vm70, %v390, 0
    %405 = vmatprep.subr.mxu0 0.0
    %406 = vmatpush1.msra.mxu0 %v391
    %407 = vmatprep.subr.mxu0 0.0
    %408 = vmatpush1.msra.mxu0 %v392
    %409 = vmatprep.subr.mxu0 0.0
    %410 = vmatpush1.msra.mxu0 %v393
    %411 = vmatprep.subr.mxu0 0.0
    %412 = vmatpush1.msra.mxu0 %v394
    %413 = vmatprep.subr.mxu0 0.0
    %414 = vmatpush1.msra.mxu0 0.0
    %415 = vmatprep.subr.mxu0 0.0
    %416 = vmatpush1.msra.mxu0 0.0
    %417 = vmatprep.subr.mxu0 0.0
    %418 = vmatpush1.msra.mxu0 0.0
    %419 = vmatprep.subr.mxu0 0.0
    %420 = vmatpush1.msra.mxu0 0.0
    %421 = vmatprep.subr.mxu0 0.0
    %422 = vmatpush1.msra.mxu0 0.0
    %423 = vmatprep.subr.mxu0 0.0
    %424 = vmatpush1.msra.mxu0 0.0
    %425 = vmatprep.subr.mxu0 0.0
    %426 = vmatpush1.msra.mxu0 0.0
    %427 = vmatprep.subr.mxu0 0.0
    %428 = vmatpush1.msra.mxu0 0.0
    %429 = vmatprep.subr.mxu0 0.0
    %430 = vmatpush1.msra.mxu0 0.0
    %431 = vmatprep.subr.mxu0 0.0
    %432 = vmatpush1.msra.mxu0 0.0
    %433 = vmatprep.subr.mxu0 0.0
    %434 = vmatpush1.msra.mxu0 0.0
    %435 = vmatprep.subr.mxu0 0.0
    %436 = vmatpush1.msra.mxu0 0.0
    %437 = vmatprep.subr.mxu0 0.0
    %438 = vmatpush1.msra.mxu0 0.0
    %439 = vmatprep.subr.mxu0 0.0
    %440 = vmatpush1.msra.mxu0 0.0
    %441 = vmatprep.subr.mxu0 0.0
    %442 = vmatpush1.msra.mxu0 0.0
    %443 = vmatprep.subr.mxu0 0.0
    %444 = vmatpush1.msra.mxu0 0.0
    %445 = vmatprep.subr.mxu0 0.0
    %446 = vmatpush1.msra.mxu0 0.0
    %447 = vmatprep.subr.mxu0 0.0
    %448 = vmatpush1.msra.mxu0 0.0
    %449 = vmatprep.subr.mxu0 0.0
    %450 = vmatpush1.msra.mxu0 0.0
    %451 = vmatprep.subr.mxu0 0.0
    %452 = vmatpush1.msra.mxu0 0.0
    %453 = vmatprep.subr.mxu0 0.0
    %454 = vmatpush1.msra.mxu0 0.0
    %455 = vmatprep.subr.mxu0 0.0
    %456 = vmatpush1.msra.mxu0 0.0
    %457 = vmatprep.subr.mxu0 0.0
    %458 = vmatpush1.msra.mxu0 0.0
    %459 = vmatprep.subr.mxu0 0.0
    %460 = vmatpush1.msra.mxu0 0.0
    %461 = vmatprep.subr.mxu0 0.0
    %462 = vmatpush1.msra.mxu0 0.0
    %463 = vmatprep.subr.mxu0 0.0
    %464 = vmatpush1.msra.mxu0 0.0
    %465 = vmatprep.subr.mxu0 0.0
    %466 = vmatpush1.msra.mxu0 0.0
    %467 = vmatprep.subr.mxu0 0.0
    %468 = vmatpush1.msra.mxu0 0.0
    %469 = vmatprep.mubr.f32.mxu0 0.0
    %470 = vmatmul.mubr.f32.gmra.mrb[0].mxu0 %v403
    %v471 = vpop.f32.mrb[0].mxu0
    %v472 = vadd.f32 %v400, %v471
    %v473 = vpop.f32.mrb[0].mxu0
    %474 = vdwg.mxu0
    %v475 = vmax.f32 %v472, 0.0
    %v476 = vld [vmem:[%s9] sm:$0xff]
    %v477 = vld [vmem:[%s9 + $0x8] sm:$0xff]
    %v478 = vld [vmem:[%s10] sm:$0x1]
    %v480 = vlaneseq
    %v481 = vshrl.u32 %v480, 7
    %v482 = vsub.s32 0, %v481
    %v483 = vrot.slane %v478, %v482
    %vm485 = vcmask 130048
    %v487 = vsel %vm485, %v475, 0
    %489 = vmatprep.subr.mxu0 0.0
    %490 = vmatpush1.msra.mxu0 %v476
    %491 = vmatprep.subr.mxu0 0.0
    %492 = vmatpush1.msra.mxu0 %v477
    %493 = vmatprep.subr.mxu0 0.0
    %494 = vmatpush1.msra.mxu0 0.0
    %495 = vmatprep.subr.mxu0 0.0
    %496 = vmatpush1.msra.mxu0 0.0
    %497 = vmatprep.subr.mxu0 0.0
    %498 = vmatpush1.msra.mxu0 0.0
    %499 = vmatprep.subr.mxu0 0.0
    %500 = vmatpush1.msra.mxu0 0.0
    %501 = vmatprep.subr.mxu0 0.0
    %502 = vmatpush1.msra.mxu0 0.0
    %503 = vmatprep.subr.mxu0 0.0
    %504 = vmatpush1.msra.mxu0 0.0
    %505 = vmatprep.subr.mxu0 0.0
    %506 = vmatpush1.msra.mxu0 0.0
    %507 = vmatprep.subr.mxu0 0.0
    %508 = vmatpush1.msra.mxu0 0.0
    %509 = vmatprep.subr.mxu0 0.0
    %510 = vmatpush1.msra.mxu0 0.0
    %511 = vmatprep.subr.mxu0 0.0
    %512 = vmatpush1.msra.mxu0 0.0
    %513 = vmatprep.subr.mxu0 0.0
    %514 = vmatpush1.msra.mxu0 0.0
    %515 = vmatprep.subr.mxu0 0.0
    %516 = vmatpush1.msra.mxu0 0.0
    %517 = vmatprep.subr.mxu0 0.0
    %518 = vmatpush1.msra.mxu0 0.0
    %519 = vmatprep.subr.mxu0 0.0
    %520 = vmatpush1.msra.mxu0 0.0
    %521 = vmatprep.subr.mxu0 0.0
    %522 = vmatpush1.msra.mxu0 0.0
    %523 = vmatprep.subr.mxu0 0.0
    %524 = vmatpush1.msra.mxu0 0.0
    %525 = vmatprep.subr.mxu0 0.0
    %526 = vmatpush1.msra.mxu0 0.0
    %527 = vmatprep.subr.mxu0 0.0
    %528 = vmatpush1.msra.mxu0 0.0
    %529 = vmatprep.subr.mxu0 0.0
    %530 = vmatpush1.msra.mxu0 0.0
    %531 = vmatprep.subr.mxu0 0.0
    %532 = vmatpush1.msra.mxu0 0.0
    %533 = vmatprep.subr.mxu0 0.0
    %534 = vmatpush1.msra.mxu0 0.0
    %535 = vmatprep.subr.mxu0 0.0
    %536 = vmatpush1.msra.mxu0 0.0
    %537 = vmatprep.subr.mxu0 0.0
    %538 = vmatpush1.msra.mxu0 0.0
    %539 = vmatprep.subr.mxu0 0.0
    %540 = vmatpush1.msra.mxu0 0.0
    %541 = vmatprep.subr.mxu0 0.0
    %542 = vmatpush1.msra.mxu0 0.0
    %543 = vmatprep.subr.mxu0 0.0
    %544 = vmatpush1.msra.mxu0 0.0
    %545 = vmatprep.subr.mxu0 0.0
    %546 = vmatpush1.msra.mxu0 0.0
    %547 = vmatprep.subr.mxu0 0.0
    %548 = vmatpush1.msra.mxu0 0.0
    %549 = vmatprep.subr.mxu0 0.0
    %550 = vmatpush1.msra.mxu0 0.0
    %551 = vmatprep.subr.mxu0 0.0
    %552 = vmatpush1.msra.mxu0 0.0
    %553 = vmatprep.mubr.f32.mxu0 0.0
    %554 = vmatmul.mubr.f32.gmra.mrb[0].mxu0 %v487
    %v555 = vpop.f32.mrb[0].mxu0
    %v556 = vadd.f32 %v483, %v555
    %v557 = vpop.f32.mrb[0].mxu0
    %558 = vdwg.mxu0
    %v559 = vmax.f32 %v556, 0.0
    %v560 = vld [vmem:[%s11] sm:$0x1]
    %v562 = vlaneseq
    %v563 = vshrl.u32 %v562, 7
    %v564 = vsub.s32 0, %v563
    %v565 = vrot.slane %v560, %v564
    %v567 = vmul.f32 %v224, %v565
    %v568 = vsel %vm235, %v567, 0.0
    %569 = vadd.xlane.f32.xlu0 %v568
    %v570 = vpop.xlane.xlu0 %569
    %v571 = vld [vmem:[%s12] sm:$0x1]
    %v573 = vlaneseq
    %v574 = vshrl.u32 %v573, 7
    %v575 = vsub.s32 0, %v574
    %v576 = vrot.slane %v571, %v575
    %v578 = vmul.f32 %v559, %v576
    %vm579 = vcmask 64512
    %v580 = vsel %vm579, %v578, 0.0
    %581 = vadd.xlane.f32.xlu0 %v580
    %v582 = vpop.xlane.xlu0 %581
    %v583 = vadd.f32 %v570, %v582
    %v584 = vld [vmem:[#allocation2] sm:$0x1]
    %586 = vset.pattern.permute.xlu0 0
    %587 = vperm.xlu0 %586, %v584
    %v588 = vpop.permute.xlu0 %587
    %v590 = vlaneseq
    %v591 = vshrl.u32 %v590, 7
    %v592 = vsub.s32 0, %v591
    %v593 = vrot.slane %v588, %v592
    %v594 = vadd.f32 %v583, %v593
    %v596 = vlaneseq
    %v597 = vshrl.u32 %v596, 7
    %v598 = vsub.s32 %v53, %v597
    %v599 = vrot.slane %v594, %v598
    %vm601 = vcmask 57344
    %602 = vst.msk [vmem:[#allocation3] sm:$0x1] %vm601, %v599
    // Predicated region
    $region58: #{tpu_custom_call.1} parent=1 // pred_check
      _
    $region59: #{tpu_custom_call.1} parent=1 // pred_check_branch
      %604 = sbr.rel (0) target = $region61
    $region60: #{tpu_custom_call.1} parent=1 // pred_region
      %s606 = ssub.s32 16, 16
      %607 = vsyncadd [#allocation4], %s606
      %s609 = sshll.u32 [#allocation3], 4
      %s610 = int_to_ptr.vmem [resolvable:$true] %s609
      %612 = dma.vmem_to_hbm [thread:$0]  %s610, 16, %s14, [#allocation4]
    $region61: #{tpu_custom_call.1} parent=1 // pred_fallthru
      _
    // Predicated region
    $region62: #{tpu_custom_call.1} parent=1 // pred_check
      _
    $region63: #{tpu_custom_call.1} parent=1 // pred_check_branch
      %614 = sbr.rel (0) target = $region65
    $region64: #{tpu_custom_call.1} parent=1 // pred_region
      %615 = dma.done [#allocation4], 16
    $region65: #{tpu_custom_call.1} parent=1 // pred_fallthru
      _
    %616 = vsyncpa [#allocation4], 1

</llo_original>
